<compile_context>
chip_gen: v7x
topology: tpu7x:2x2x1
jax: 0.10.0
libtpu: 0.0.40
codegen_flags: <defaults>
</compile_context>

<pallas_src>
import jax
import jax.numpy as jnp
from jax import lax
from jax.experimental import pallas as pl
from jax.experimental.pallas import tpu as pltpu  # noqa: F401  (TPU backend assumed)

# ---- problem sizes (small, consistent with the module's forward) -------------
N_MELS  = 16                 # spectrogram frequency bins
T       = 16                 # spectrogram time frames -> token sequence length
D_MODEL = 32                 # encoder token width
HIDDEN  = 32                 # decoder hidden width
CTX     = 4                  # context_length
NUM_WIN = T - CTX - 1        # matches range(length - context_length - 1) -> 11


# ---- fused encoder + window-decoder kernel (single grid step) -----------------
def fused_kernel(spec_ref, w_enc_ref, b_enc_ref, w1_ref, b1_ref, w2_ref, b2_ref,
                 out_ref):
    # Encoder: tokens = tanh(spec^T @ W_enc + b_enc) without an explicit
    # transpose — contract over spec's first (freq) axis on the MXU.
    tok = lax.dot_general(
        spec_ref[...], w_enc_ref[...],
        dimension_numbers=(((0,), (0,)), ((), ())),
        preferred_element_type=jnp.float32) + b_enc_ref[...]
    tok = jnp.tanh(tok)                                        # (T, D_MODEL)

    # Decoder layer 1 as shifted matmuls:
    #   x[r, :] = concat_j tok[r + j, :]   (j = 0..CTX)
    #   x @ W1  = sum_j tok[j : j+NUM_WIN, :] @ W1[j*D_MODEL:(j+1)*D_MODEL, :]
    # All slices are static; everything stays on the MXU.
    w1 = w1_ref[...]                                           # ((CTX+1)*D_MODEL, HIDDEN)
    acc = jnp.zeros((NUM_WIN, HIDDEN), jnp.float32)
    for j in range(CTX + 1):                                   # static unroll
        acc = acc + jnp.dot(
            tok[j:j + NUM_WIN, :],
            w1[j * D_MODEL:(j + 1) * D_MODEL, :],
            preferred_element_type=jnp.float32)
    h = jnp.maximum(acc + b1_ref[...], 0.0)                    # (NUM_WIN, HIDDEN)

    # Decoder layer 2 -> predicted frames.
    out_ref[...] = (jnp.dot(h, w2_ref[...], preferred_element_type=jnp.float32)
                    + b2_ref[...])                             # (NUM_WIN, N_MELS)


# ---- wrapper ------------------------------------------------------------------
def spectrogram_enc_dec(spec, w_enc, b_enc, w1, b1, w2, b2):
    # One pallas_call, no grid: all operands/output are full-array VMEM blocks
    # (well under any VMEM budget at these sizes).
    # NOTE(scaling): if T / NUM_WIN ever grow large, re-tile windows (>=128 rows),
    # pad N_MELS to a lane-dense multiple of 128, tile tokens with a CTX-row halo,
    # and consider bf16 MXU operands on v6e/v7x — irrelevant at this toy size.
    return pl.pallas_call(
        fused_kernel,
        out_shape=jax.ShapeDtypeStruct((NUM_WIN, N_MELS), jnp.float32),
    )(spec, w_enc, b_enc, w1, b1, w2, b2)


# ---- pure-JAX reference for a correctness check -------------------------------
def reference(spec, w_enc, b_enc, w1, b1, w2, b2):
    tokens = jnp.tanh(spec.T @ w_enc + b_enc)                  # (T, D_MODEL)
    wins = jnp.stack([tokens[i:i + CTX + 1] for i in range(NUM_WIN)])
    x = wins.reshape(NUM_WIN, (CTX + 1) * D_MODEL)
    h = jnp.maximum(x @ w1 + b1, 0.0)
    return h @ w2 + b2


if __name__ == "__main__":
    key = jax.random.PRNGKey(0)
    ks = jax.random.split(key, 7)
    spec  = jax.random.normal(ks[0], (N_MELS, T), jnp.float32)
    w_enc = jax.random.normal(ks[1], (N_MELS, D_MODEL), jnp.float32) * 0.1
    b_enc = jax.random.normal(ks[2], (1, D_MODEL), jnp.float32) * 0.1
    w1    = jax.random.normal(ks[3], ((CTX + 1) * D_MODEL, HIDDEN), jnp.float32) * 0.1
    b1    = jax.random.normal(ks[4], (1, HIDDEN), jnp.float32) * 0.1
    w2    = jax.random.normal(ks[5], (HIDDEN, N_MELS), jnp.float32) * 0.1
    b2    = jax.random.normal(ks[6], (1, N_MELS), jnp.float32) * 0.1

    pred = spectrogram_enc_dec(spec, w_enc, b_enc, w1, b1, w2, b2)
    pred = jax.block_until_ready(pred)

    ref = reference(spec, w_enc, b_enc, w1, b1, w2, b2)
    assert pred.shape == (NUM_WIN, N_MELS), pred.shape
    assert jnp.allclose(pred, ref, atol=1e-4, rtol=1e-4), "mismatch vs reference"
    print("KERNEL_OK")
</pallas_src>

<mosaic_0001>
module attributes {stable_mosaic.version = 11 : i64} {
  func.func @fused_kernel(%arg0: memref<16x16xf32, #tpu.memory_space<vmem>>, %arg1: memref<16x32xf32, #tpu.memory_space<vmem>>, %arg2: memref<1x32xf32, #tpu.memory_space<vmem>>, %arg3: memref<160x32xf32, #tpu.memory_space<vmem>>, %arg4: memref<1x32xf32, #tpu.memory_space<vmem>>, %arg5: memref<32x16xf32, #tpu.memory_space<vmem>>, %arg6: memref<1x16xf32, #tpu.memory_space<vmem>>, %arg7: memref<11x16xf32, #tpu.memory_space<vmem>>) attributes {dimension_semantics = [], scalar_prefetch = 0 : i64, scratch_operands = 0 : i64, tpu.core_type = #tpu.core_type<tc>} {
    %c0 = arith.constant 0 : index
    %c0_0 = arith.constant 0 : index
    %0 = vector.load %arg0[%c0, %c0_0] : memref<16x16xf32, #tpu.memory_space<vmem>>, vector<16x16xf32>
    %c0_1 = arith.constant 0 : index
    %c0_2 = arith.constant 0 : index
    %1 = vector.load %arg1[%c0_1, %c0_2] : memref<16x32xf32, #tpu.memory_space<vmem>>, vector<16x32xf32>
    %cst = arith.constant dense<0.000000e+00> : vector<16x32xf32>
    %2 = tpu.matmul %0, %1, %cst {dimension_numbers = #tpu.dot_dimension_numbers<[0], [0], [1], [1], [0, 1, 1, 1], [], []>} : vector<16x16xf32>, vector<16x32xf32>, vector<16x32xf32> -> vector<16x32xf32>
    %c0_3 = arith.constant 0 : index
    %c0_4 = arith.constant 0 : index
    %3 = vector.load %arg2[%c0_3, %c0_4] : memref<1x32xf32, #tpu.memory_space<vmem>>, vector<1x32xf32>
    %4 = vector.broadcast %3 : vector<1x32xf32> to vector<16x32xf32>
    %5 = arith.addf %2, %4 : vector<16x32xf32>
    %6 = math.tanh %5 : vector<16x32xf32>
    %c0_5 = arith.constant 0 : index
    %c0_6 = arith.constant 0 : index
    %7 = vector.load %arg3[%c0_5, %c0_6] : memref<160x32xf32, #tpu.memory_space<vmem>>, vector<160x32xf32>
    %cst_7 = arith.constant 0.000000e+00 : f32
    %8 = vector.broadcast %cst_7 : f32 to vector<11x32xf32>
    %9 = vector.extract_strided_slice %6 {offsets = [0, 0], sizes = [11, 32], strides = [1, 1]} : vector<16x32xf32> to vector<11x32xf32>
    %10 = vector.extract_strided_slice %7 {offsets = [0, 0], sizes = [32, 32], strides = [1, 1]} : vector<160x32xf32> to vector<32x32xf32>
    %cst_8 = arith.constant dense<0.000000e+00> : vector<11x32xf32>
    %11 = tpu.matmul %9, %10, %cst_8 {dimension_numbers = #tpu.dot_dimension_numbers<[1], [0], [0], [1], [0, 0, 1, 1], [], []>} : vector<11x32xf32>, vector<32x32xf32>, vector<11x32xf32> -> vector<11x32xf32>
    %12 = arith.addf %8, %11 : vector<11x32xf32>
    %13 = vector.extract_strided_slice %6 {offsets = [1, 0], sizes = [11, 32], strides = [1, 1]} : vector<16x32xf32> to vector<11x32xf32>
    %14 = vector.extract_strided_slice %7 {offsets = [32, 0], sizes = [32, 32], strides = [1, 1]} : vector<160x32xf32> to vector<32x32xf32>
    %cst_9 = arith.constant dense<0.000000e+00> : vector<11x32xf32>
    %15 = tpu.matmul %13, %14, %cst_9 {dimension_numbers = #tpu.dot_dimension_numbers<[1], [0], [0], [1], [0, 0, 1, 1], [], []>} : vector<11x32xf32>, vector<32x32xf32>, vector<11x32xf32> -> vector<11x32xf32>
    %16 = arith.addf %12, %15 : vector<11x32xf32>
    %17 = vector.extract_strided_slice %6 {offsets = [2, 0], sizes = [11, 32], strides = [1, 1]} : vector<16x32xf32> to vector<11x32xf32>
    %18 = vector.extract_strided_slice %7 {offsets = [64, 0], sizes = [32, 32], strides = [1, 1]} : vector<160x32xf32> to vector<32x32xf32>
    %cst_10 = arith.constant dense<0.000000e+00> : vector<11x32xf32>
    %19 = tpu.matmul %17, %18, %cst_10 {dimension_numbers = #tpu.dot_dimension_numbers<[1], [0], [0], [1], [0, 0, 1, 1], [], []>} : vector<11x32xf32>, vector<32x32xf32>, vector<11x32xf32> -> vector<11x32xf32>
    %20 = arith.addf %16, %19 : vector<11x32xf32>
    %21 = vector.extract_strided_slice %6 {offsets = [3, 0], sizes = [11, 32], strides = [1, 1]} : vector<16x32xf32> to vector<11x32xf32>
    %22 = vector.extract_strided_slice %7 {offsets = [96, 0], sizes = [32, 32], strides = [1, 1]} : vector<160x32xf32> to vector<32x32xf32>
    %cst_11 = arith.constant dense<0.000000e+00> : vector<11x32xf32>
    %23 = tpu.matmul %21, %22, %cst_11 {dimension_numbers = #tpu.dot_dimension_numbers<[1], [0], [0], [1], [0, 0, 1, 1], [], []>} : vector<11x32xf32>, vector<32x32xf32>, vector<11x32xf32> -> vector<11x32xf32>
    %24 = arith.addf %20, %23 : vector<11x32xf32>
    %25 = vector.extract_strided_slice %6 {offsets = [4, 0], sizes = [11, 32], strides = [1, 1]} : vector<16x32xf32> to vector<11x32xf32>
    %26 = vector.extract_strided_slice %7 {offsets = [128, 0], sizes = [32, 32], strides = [1, 1]} : vector<160x32xf32> to vector<32x32xf32>
    %cst_12 = arith.constant dense<0.000000e+00> : vector<11x32xf32>
    %27 = tpu.matmul %25, %26, %cst_12 {dimension_numbers = #tpu.dot_dimension_numbers<[1], [0], [0], [1], [0, 0, 1, 1], [], []>} : vector<11x32xf32>, vector<32x32xf32>, vector<11x32xf32> -> vector<11x32xf32>
    %28 = arith.addf %24, %27 : vector<11x32xf32>
    %c0_13 = arith.constant 0 : index
    %c0_14 = arith.constant 0 : index
    %29 = vector.load %arg4[%c0_13, %c0_14] : memref<1x32xf32, #tpu.memory_space<vmem>>, vector<1x32xf32>
    %30 = vector.broadcast %29 : vector<1x32xf32> to vector<11x32xf32>
    %31 = arith.addf %28, %30 : vector<11x32xf32>
    %cst_15 = arith.constant 0.000000e+00 : f32
    %32 = vector.broadcast %cst_15 : f32 to vector<11x32xf32>
    %33 = arith.maximumf %31, %32 : vector<11x32xf32>
    %c0_16 = arith.constant 0 : index
    %c0_17 = arith.constant 0 : index
    %34 = vector.load %arg5[%c0_16, %c0_17] : memref<32x16xf32, #tpu.memory_space<vmem>>, vector<32x16xf32>
    %cst_18 = arith.constant dense<0.000000e+00> : vector<11x16xf32>
    %35 = tpu.matmul %33, %34, %cst_18 {dimension_numbers = #tpu.dot_dimension_numbers<[1], [0], [0], [1], [0, 0, 1, 1], [], []>} : vector<11x32xf32>, vector<32x16xf32>, vector<11x16xf32> -> vector<11x16xf32>
    %c0_19 = arith.constant 0 : index
    %c0_20 = arith.constant 0 : index
    %36 = vector.load %arg6[%c0_19, %c0_20] : memref<1x16xf32, #tpu.memory_space<vmem>>, vector<1x16xf32>
    %37 = vector.broadcast %36 : vector<1x16xf32> to vector<11x16xf32>
    %38 = arith.addf %35, %37 : vector<11x16xf32>
    %c0_21 = arith.constant 0 : index
    %c0_22 = arith.constant 0 : index
    %39 = vector.load %arg7[%c0_21, %c0_22] : memref<11x16xf32, #tpu.memory_space<vmem>>, vector<11x16xf32>
    tpu.vector_store %arg7[%c0_21, %c0_22], %38 {strides = array<i32>} : memref<11x16xf32, #tpu.memory_space<vmem>>, vector<11x16xf32>,
    return
  }
}

</mosaic_0001>

<llo_original>
// kernel: tpu_custom_call.1
$region0: #{tpu_custom_call.1}
  #allocation0 [shape = 'u32[]', space=smem, size = 0x4, offset = 0x4, fixed_abs, tag = 'smem constant byte address 0x4 - core index']
  #allocation1 [shape = 'u32[144,128]{1,0:T(1,128)}', space=vmem, size = 0x12000, scoped, tag = 'internal scratch']
  %s0 = inlined_call_operand.vmem [shape: f32[16,16], index: 0, kind: input, shape index: {}]
  %s1 = inlined_call_operand.vmem [shape: f32[16,32], index: 1, kind: input, shape index: {}]
  %s2 = inlined_call_operand.vmem [shape: f32[1,32], index: 2, kind: input, shape index: {}]
  %s3 = inlined_call_operand.vmem [shape: f32[160,32], index: 3, kind: input, shape index: {}]
  %s4 = inlined_call_operand.vmem [shape: f32[1,32], index: 4, kind: input, shape index: {}]
  %s5 = inlined_call_operand.vmem [shape: f32[32,16], index: 5, kind: input, shape index: {}]
  %s6 = inlined_call_operand.vmem [shape: f32[1,16], index: 6, kind: input, shape index: {}]
  %s7 = inlined_call_operand.hbm [shape: f32[11,16], index: 7, kind: output, shape index: {}]
  %s8 = sld [smem:[#allocation0]]
  $region38: #{tpu_custom_call.1} parent=0
    _
  %s10 = ssub.s32 1, %s8
  %s11 = scalar_select 0, %s10, %s8
  $region1: #{tpu_custom_call.1} parent=0
    #allocation2 [shape = 'u8[8192]{0}', space=vmem, size = 0x2000, scoped, tag = 'output window, operand 0, single buffered']
    #allocation3 [shape = 's32[1]{0}', space=sflag, size = 0x4, scoped, tag = 'scoped memory for tpu_custom_call.1']
    %12 = vsyncpa [#allocation3], 0
    // Predicated region
    $region2: #{tpu_custom_call.1} parent=1 // pred_check
      _
    $region3: #{tpu_custom_call.1} parent=1 // pred_check_branch
      %14 = sbr.rel (0) target = $region5
    $region4: #{tpu_custom_call.1} parent=1 // pred_region
      _
    $region5: #{tpu_custom_call.1} parent=1 // pred_fallthru
      _
    // Predicated region
    $region6: #{tpu_custom_call.1} parent=1 // pred_check
      _
    $region7: #{tpu_custom_call.1} parent=1 // pred_check_branch
      %16 = sbr.rel (0) target = $region9
    $region8: #{tpu_custom_call.1} parent=1 // pred_region
      _
    $region9: #{tpu_custom_call.1} parent=1 // pred_fallthru
      _
    // Predicated region
    $region10: #{tpu_custom_call.1} parent=1 // pred_check
      _
    $region11: #{tpu_custom_call.1} parent=1 // pred_check_branch
      %18 = sbr.rel (0) target = $region13
    $region12: #{tpu_custom_call.1} parent=1 // pred_region
      _
    $region13: #{tpu_custom_call.1} parent=1 // pred_fallthru
      _
    // Predicated region
    $region14: #{tpu_custom_call.1} parent=1 // pred_check
      _
    $region15: #{tpu_custom_call.1} parent=1 // pred_check_branch
      %20 = sbr.rel (0) target = $region17
    $region16: #{tpu_custom_call.1} parent=1 // pred_region
      _
    $region17: #{tpu_custom_call.1} parent=1 // pred_fallthru
      _
    // Predicated region
    $region18: #{tpu_custom_call.1} parent=1 // pred_check
      _
    $region19: #{tpu_custom_call.1} parent=1 // pred_check_branch
      %22 = sbr.rel (0) target = $region21
    $region20: #{tpu_custom_call.1} parent=1 // pred_region
      _
    $region21: #{tpu_custom_call.1} parent=1 // pred_fallthru
      _
    // Predicated region
    $region22: #{tpu_custom_call.1} parent=1 // pred_check
      _
    $region23: #{tpu_custom_call.1} parent=1 // pred_check_branch
      %24 = sbr.rel (0) target = $region25
    $region24: #{tpu_custom_call.1} parent=1 // pred_region
      _
    $region25: #{tpu_custom_call.1} parent=1 // pred_fallthru
      _
    // Predicated region
    $region26: #{tpu_custom_call.1} parent=1 // pred_check
      _
    $region27: #{tpu_custom_call.1} parent=1 // pred_check_branch
      %26 = sbr.rel (0) target = $region29
    $region28: #{tpu_custom_call.1} parent=1 // pred_region
      _
    $region29: #{tpu_custom_call.1} parent=1 // pred_fallthru
      _
    %v27 = vld [vmem:[%s0] sm:$0xff]
    %v28 = vld [vmem:[%s0 + $0x8] sm:$0xff]
    %v29 = vld [vmem:[%s1] sm:$0xff]
    %v30 = vld [vmem:[%s1 + $0x8] sm:$0xff]
    %v31 = vld [vmem:[%s2] sm:$0x1]
    %v33 = vlaneseq
    %v34 = vshrl.u32 %v33, 7
    %v35 = vsub.s32 0, %v34
    %v36 = vrot.slane %v31, %v35
    %38 = vxpose.xlu0.b32.start [1/16] %v27, 128
    %39 = vxpose.xlu0.b32.cont [2/16] %v28, 128
    %40 = vxpose.xlu0.b32.cont [3/16] 0.0, 128
    %41 = vxpose.xlu0.b32.cont [4/16] 0.0, 128
    %42 = vxpose.xlu0.b32.cont [5/16] 0.0, 128
    %43 = vxpose.xlu0.b32.cont [6/16] 0.0, 128
    %44 = vxpose.xlu0.b32.cont [7/16] 0.0, 128
    %45 = vxpose.xlu0.b32.cont [8/16] 0.0, 128
    %46 = vxpose.xlu0.b32.cont [9/16] 0.0, 128
    %47 = vxpose.xlu0.b32.cont [10/16] 0.0, 128
    %48 = vxpose.xlu0.b32.cont [11/16] 0.0, 128
    %49 = vxpose.xlu0.b32.cont [12/16] 0.0, 128
    %50 = vxpose.xlu0.b32.cont [13/16] 0.0, 128
    %51 = vxpose.xlu0.b32.cont [14/16] 0.0, 128
    %52 = vxpose.xlu0.b32.cont [15/16] 0.0, 128
    %53 = vxpose.xlu0.b32.end [16/16] 0.0, 128
    %v54 = vpop.trf.xlu0
    %v55 = vpop.trf.xlu0
    %v56 = vpop.trf.xlu0
    %v57 = vpop.trf.xlu0
    %v58 = vpop.trf.xlu0
    %v59 = vpop.trf.xlu0
    %v60 = vpop.trf.xlu0
    %v61 = vpop.trf.xlu0
    %v62 = vpop.trf.xlu0
    %v63 = vpop.trf.xlu0
    %v64 = vpop.trf.xlu0
    %v65 = vpop.trf.xlu0
    %v66 = vpop.trf.xlu0
    %v67 = vpop.trf.xlu0
    %v68 = vpop.trf.xlu0
    %v69 = vpop.trf.xlu0
    %vm70 = vcmask 130048
    %v72 = vsel %vm70, %v54, 0
    %v75 = vsel %vm70, %v55, 0
    %77 = vmatprep.subr.mxu0 0.0
    %78 = vmatpush1.msra.mxu0 %v29
    %79 = vmatprep.subr.mxu0 0.0
    %80 = vmatpush1.msra.mxu0 %v30
    %81 = vmatprep.subr.mxu0 0.0
    %82 = vmatpush1.msra.mxu0 0.0
    %83 = vmatprep.subr.mxu0 0.0
    %84 = vmatpush1.msra.mxu0 0.0
    %85 = vmatprep.subr.mxu0 0.0
    %86 = vmatpush1.msra.mxu0 0.0
    %87 = vmatprep.subr.mxu0 0.0
    %88 = vmatpush1.msra.mxu0 0.0
    %89 = vmatprep.subr.mxu0 0.0
    %90 = vmatpush1.msra.mxu0 0.0
    %91 = vmatprep.subr.mxu0 0.0
    %92 = vmatpush1.msra.mxu0 0.0
    %93 = vmatprep.subr.mxu0 0.0
    %94 = vmatpush1.msra.mxu0 0.0
    %95 = vmatprep.subr.mxu0 0.0
    %96 = vmatpush1.msra.mxu0 0.0
    %97 = vmatprep.subr.mxu0 0.0
    %98 = vmatpush1.msra.mxu0 0.0
    %99 = vmatprep.subr.mxu0 0.0
    %100 = vmatpush1.msra.mxu0 0.0
    %101 = vmatprep.subr.mxu0 0.0
    %102 = vmatpush1.msra.mxu0 0.0
    %103 = vmatprep.subr.mxu0 0.0
    %104 = vmatpush1.msra.mxu0 0.0
    %105 = vmatprep.subr.mxu0 0.0
    %106 = vmatpush1.msra.mxu0 0.0
    %107 = vmatprep.subr.mxu0 0.0
    %108 = vmatpush1.msra.mxu0 0.0
    %109 = vmatprep.subr.mxu0 0.0
    %110 = vmatpush1.msra.mxu0 0.0
    %111 = vmatprep.subr.mxu0 0.0
    %112 = vmatpush1.msra.mxu0 0.0
    %113 = vmatprep.subr.mxu0 0.0
    %114 = vmatpush1.msra.mxu0 0.0
    %115 = vmatprep.subr.mxu0 0.0
    %116 = vmatpush1.msra.mxu0 0.0
    %117 = vmatprep.subr.mxu0 0.0
    %118 = vmatpush1.msra.mxu0 0.0
    %119 = vmatprep.subr.mxu0 0.0
    %120 = vmatpush1.msra.mxu0 0.0
    %121 = vmatprep.subr.mxu0 0.0
    %122 = vmatpush1.msra.mxu0 0.0
    %123 = vmatprep.subr.mxu0 0.0
    %124 = vmatpush1.msra.mxu0 0.0
    %125 = vmatprep.subr.mxu0 0.0
    %126 = vmatpush1.msra.mxu0 0.0
    %127 = vmatprep.subr.mxu0 0.0
    %128 = vmatpush1.msra.mxu0 0.0
    %129 = vmatprep.subr.mxu0 0.0
    %130 = vmatpush1.msra.mxu0 0.0
    %131 = vmatprep.subr.mxu0 0.0
    %132 = vmatpush1.msra.mxu0 0.0
    %133 = vmatprep.subr.mxu0 0.0
    %134 = vmatpush1.msra.mxu0 0.0
    %135 = vmatprep.subr.mxu0 0.0
    %136 = vmatpush1.msra.mxu0 0.0
    %137 = vmatprep.subr.mxu0 0.0
    %138 = vmatpush1.msra.mxu0 0.0
    %139 = vmatprep.subr.mxu0 0.0
    %140 = vmatpush1.msra.mxu0 0.0
    %141 = vmatprep.mubr.f32.mxu0 0.0
    %142 = vmatmul.mubr.f32.gmra.mrb[0].mxu0 %v72
    %v143 = vpop.f32.mrb[0].mxu0
    %v144 = vadd.f32 %v36, %v143
    %v145 = vpop.f32.mrb[0].mxu0
    %146 = vmatprep.mubr.f32.mxu0 0.0
    %147 = vmatmul.mubr.f32.gmra.mrb[0].mxu0 %v75
    %v148 = vpop.f32.mrb[0].mxu0
    %v149 = vadd.f32 %v36, %v148
    %v150 = vpop.f32.mrb[0].mxu0
    %151 = vdwg.mxu0
    %v152 = vtanh.pop %v144
    %v153 = vtanh.pop %v149
    %v154 = vld [vmem:[%s3] sm:$0xff]
    %v155 = vld [vmem:[%s3 + $0x8] sm:$0xff]
    %v156 = vld [vmem:[%s3 + $0x10] sm:$0xff]
    %v157 = vld [vmem:[%s3 + $0x18] sm:$0xff]
    %v158 = vld [vmem:[%s3 + $0x20] sm:$0xff]
    %v159 = vld [vmem:[%s3 + $0x28] sm:$0xff]
    %v160 = vld [vmem:[%s3 + $0x30] sm:$0xff]
    %v161 = vld [vmem:[%s3 + $0x38] sm:$0xff]
    %v162 = vld [vmem:[%s3 + $0x40] sm:$0xff]
    %v163 = vld [vmem:[%s3 + $0x48] sm:$0xff]
    %v164 = vld [vmem:[%s3 + $0x50] sm:$0xff]
    %v165 = vld [vmem:[%s3 + $0x58] sm:$0xff]
    %v166 = vld [vmem:[%s3 + $0x60] sm:$0xff]
    %v167 = vld [vmem:[%s3 + $0x68] sm:$0xff]
    %v168 = vld [vmem:[%s3 + $0x70] sm:$0xff]
    %v169 = vld [vmem:[%s3 + $0x78] sm:$0xff]
    %v170 = vld [vmem:[%s3 + $0x80] sm:$0xff]
    %v171 = vld [vmem:[%s3 + $0x88] sm:$0xff]
    %v172 = vld [vmem:[%s3 + $0x90] sm:$0xff]
    %v173 = vld [vmem:[%s3 + $0x98] sm:$0xff]
    %vm176 = vcmask 1046528
    %v177 = vrot.slane %v152, 1
    %v178 = vrot.slane %v153, 1
    %v179 = vsel %vm176, %v177, %v178
    %vm180 = vcmask 261120
    %v181 = vsel %vm180, %v179, 0
    %v183 = vsel %vm180, %v178, 0
    %185 = vmatprep.subr.mxu0 0.0
    %186 = vmatpush1.msra.mxu0 %v158
    %187 = vmatprep.subr.mxu0 0.0
    %188 = vmatpush1.msra.mxu0 %v159
    %189 = vmatprep.subr.mxu0 0.0
    %190 = vmatpush1.msra.mxu0 %v160
    %191 = vmatprep.subr.mxu0 0.0
    %192 = vmatpush1.msra.mxu0 %v161
    %193 = vmatprep.subr.mxu0 0.0
    %194 = vmatpush1.msra.mxu0 0.0
    %195 = vmatprep.subr.mxu0 0.0
    %196 = vmatpush1.msra.mxu0 0.0
    %197 = vmatprep.subr.mxu0 0.0
    %198 = vmatpush1.msra.mxu0 0.0
    %199 = vmatprep.subr.mxu0 0.0
    %200 = vmatpush1.msra.mxu0 0.0
    %201 = vmatprep.subr.mxu0 0.0
    %202 = vmatpush1.msra.mxu0 0.0
    %203 = vmatprep.subr.mxu0 0.0
    %204 = vmatpush1.msra.mxu0 0.0
    %205 = vmatprep.subr.mxu0 0.0
    %206 = vmatpush1.msra.mxu0 0.0
    %207 = vmatprep.subr.mxu0 0.0
    %208 = vmatpush1.msra.mxu0 0.0
    %209 = vmatprep.subr.mxu0 0.0
    %210 = vmatpush1.msra.mxu0 0.0
    %211 = vmatprep.subr.mxu0 0.0
    %212 = vmatpush1.msra.mxu0 0.0
    %213 = vmatprep.subr.mxu0 0.0
    %214 = vmatpush1.msra.mxu0 0.0
    %215 = vmatprep.subr.mxu0 0.0
    %216 = vmatpush1.msra.mxu0 0.0
    %217 = vmatprep.subr.mxu0 0.0
    %218 = vmatpush1.msra.mxu0 0.0
    %219 = vmatprep.subr.mxu0 0.0
    %220 = vmatpush1.msra.mxu0 0.0
    %221 = vmatprep.subr.mxu0 0.0
    %222 = vmatpush1.msra.mxu0 0.0
    %223 = vmatprep.subr.mxu0 0.0
    %224 = vmatpush1.msra.mxu0 0.0
    %225 = vmatprep.subr.mxu0 0.0
    %226 = vmatpush1.msra.mxu0 0.0
    %227 = vmatprep.subr.mxu0 0.0
    %228 = vmatpush1.msra.mxu0 0.0
    %229 = vmatprep.subr.mxu0 0.0
    %230 = vmatpush1.msra.mxu0 0.0
    %231 = vmatprep.subr.mxu0 0.0
    %232 = vmatpush1.msra.mxu0 0.0
    %233 = vmatprep.subr.mxu0 0.0
    %234 = vmatpush1.msra.mxu0 0.0
    %235 = vmatprep.subr.mxu0 0.0
    %236 = vmatpush1.msra.mxu0 0.0
    %237 = vmatprep.subr.mxu0 0.0
    %238 = vmatpush1.msra.mxu0 0.0
    %239 = vmatprep.subr.mxu0 0.0
    %240 = vmatpush1.msra.mxu0 0.0
    %241 = vmatprep.subr.mxu0 0.0
    %242 = vmatpush1.msra.mxu0 0.0
    %243 = vmatprep.subr.mxu0 0.0
    %244 = vmatpush1.msra.mxu0 0.0
    %245 = vmatprep.subr.mxu0 0.0
    %246 = vmatpush1.msra.mxu0 0.0
    %247 = vmatprep.subr.mxu0 0.0
    %248 = vmatpush1.msra.mxu0 0.0
    %249 = vmatprep.mubr.f32.mxu0 0.0
    %250 = vmatmul.mubr.f32.gmra.mrb[0].mxu0 %v181
    %v251 = vpop.f32.mrb[0].mxu0
    %v252 = vadd.f32 0.0, %v251
    %v253 = vpop.f32.mrb[0].mxu0
    %254 = vmatprep.mubr.f32.mxu0 0.0
    %255 = vmatmul.mubr.f32.gmra.mrb[0].mxu0 %v183
    %v256 = vpop.f32.mrb[0].mxu0
    %v257 = vadd.f32 0.0, %v256
    %v258 = vpop.f32.mrb[0].mxu0
    %259 = vdwg.mxu0
    %v260 = vsel %vm180, %v152, 0
    %v262 = vsel %vm180, %v153, 0
    %264 = vmatprep.subr.mxu0 0.0
    %265 = vmatpush1.msra.mxu0 %v154
    %266 = vmatprep.subr.mxu0 0.0
    %267 = vmatpush1.msra.mxu0 %v155
    %268 = vmatprep.subr.mxu0 0.0
    %269 = vmatpush1.msra.mxu0 %v156
    %270 = vmatprep.subr.mxu0 0.0
    %271 = vmatpush1.msra.mxu0 %v157
    %272 = vmatprep.subr.mxu0 0.0
    %273 = vmatpush1.msra.mxu0 0.0
    %274 = vmatprep.subr.mxu0 0.0
    %275 = vmatpush1.msra.mxu0 0.0
    %276 = vmatprep.subr.mxu0 0.0
    %277 = vmatpush1.msra.mxu0 0.0
    %278 = vmatprep.subr.mxu0 0.0
    %279 = vmatpush1.msra.mxu0 0.0
    %280 = vmatprep.subr.mxu0 0.0
    %281 = vmatpush1.msra.mxu0 0.0
    %282 = vmatprep.subr.mxu0 0.0
    %283 = vmatpush1.msra.mxu0 0.0
    %284 = vmatprep.subr.mxu0 0.0
    %285 = vmatpush1.msra.mxu0 0.0
    %286 = vmatprep.subr.mxu0 0.0
    %287 = vmatpush1.msra.mxu0 0.0
    %288 = vmatprep.subr.mxu0 0.0
    %289 = vmatpush1.msra.mxu0 0.0
    %290 = vmatprep.subr.mxu0 0.0
    %291 = vmatpush1.msra.mxu0 0.0
    %292 = vmatprep.subr.mxu0 0.0
    %293 = vmatpush1.msra.mxu0 0.0
    %294 = vmatprep.subr.mxu0 0.0
    %295 = vmatpush1.msra.mxu0 0.0
    %296 = vmatprep.subr.mxu0 0.0
    %297 = vmatpush1.msra.mxu0 0.0
    %298 = vmatprep.subr.mxu0 0.0
    %299 = vmatpush1.msra.mxu0 0.0
    %300 = vmatprep.subr.mxu0 0.0
    %301 = vmatpush1.msra.mxu0 0.0
    %302 = vmatprep.subr.mxu0 0.0
    %303 = vmatpush1.msra.mxu0 0.0
    %304 = vmatprep.subr.mxu0 0.0
    %305 = vmatpush1.msra.mxu0 0.0
    %306 = vmatprep.subr.mxu0 0.0
    %307 = vmatpush1.msra.mxu0 0.0
    %308 = vmatprep.subr.mxu0 0.0
    %309 = vmatpush1.msra.mxu0 0.0
    %310 = vmatprep.subr.mxu0 0.0
    %311 = vmatpush1.msra.mxu0 0.0
    %312 = vmatprep.subr.mxu0 0.0
    %313 = vmatpush1.msra.mxu0 0.0
    %314 = vmatprep.subr.mxu0 0.0
    %315 = vmatpush1.msra.mxu0 0.0
    %316 = vmatprep.subr.mxu0 0.0
    %317 = vmatpush1.msra.mxu0 0.0
    %318 = vmatprep.subr.mxu0 0.0
    %319 = vmatpush1.msra.mxu0 0.0
    %320 = vmatprep.subr.mxu0 0.0
    %321 = vmatpush1.msra.mxu0 0.0
    %322 = vmatprep.subr.mxu0 0.0
    %323 = vmatpush1.msra.mxu0 0.0
    %324 = vmatprep.subr.mxu0 0.0
    %325 = vmatpush1.msra.mxu0 0.0
    %326 = vmatprep.subr.mxu0 0.0
    %327 = vmatpush1.msra.mxu0 0.0
    %328 = vmatprep.mubr.f32.mxu0 0.0
    %329 = vmatmul.mubr.f32.gmra.mrb[0].mxu0 %v260
    %v330 = vpop.f32.mrb[0].mxu0
    %v331 = vadd.f32 %v252, %v330
    %v332 = vpop.f32.mrb[0].mxu0
    %333 = vmatprep.mubr.f32.mxu0 0.0
    %334 = vmatmul.mubr.f32.gmra.mrb[0].mxu0 %v262
    %v335 = vpop.f32.mrb[0].mxu0
    %v336 = vadd.f32 %v257, %v335
    %v337 = vpop.f32.mrb[0].mxu0
    %338 = vdwg.mxu0
    %vm339 = vcmask 1045504
    %v340 = vrot.slane %v152, 2
    %v341 = vrot.slane %v153, 2
    %v342 = vsel %vm339, %v340, %v341
    %v343 = vsel %vm180, %v342, 0
    %v345 = vsel %vm180, %v341, 0
    %347 = vmatprep.subr.mxu0 0.0
    %348 = vmatpush1.msra.mxu0 %v162
    %349 = vmatprep.subr.mxu0 0.0
    %350 = vmatpush1.msra.mxu0 %v163
    %351 = vmatprep.subr.mxu0 0.0
    %352 = vmatpush1.msra.mxu0 %v164
    %353 = vmatprep.subr.mxu0 0.0
    %354 = vmatpush1.msra.mxu0 %v165
    %355 = vmatprep.subr.mxu0 0.0
    %356 = vmatpush1.msra.mxu0 0.0
    %357 = vmatprep.subr.mxu0 0.0
    %358 = vmatpush1.msra.mxu0 0.0
    %359 = vmatprep.subr.mxu0 0.0
    %360 = vmatpush1.msra.mxu0 0.0
    %361 = vmatprep.subr.mxu0 0.0
    %362 = vmatpush1.msra.mxu0 0.0
    %363 = vmatprep.subr.mxu0 0.0
    %364 = vmatpush1.msra.mxu0 0.0
    %365 = vmatprep.subr.mxu0 0.0
    %366 = vmatpush1.msra.mxu0 0.0
    %367 = vmatprep.subr.mxu0 0.0
    %368 = vmatpush1.msra.mxu0 0.0
    %369 = vmatprep.subr.mxu0 0.0
    %370 = vmatpush1.msra.mxu0 0.0
    %371 = vmatprep.subr.mxu0 0.0
    %372 = vmatpush1.msra.mxu0 0.0
    %373 = vmatprep.subr.mxu0 0.0
    %374 = vmatpush1.msra.mxu0 0.0
    %375 = vmatprep.subr.mxu0 0.0
    %376 = vmatpush1.msra.mxu0 0.0
    %377 = vmatprep.subr.mxu0 0.0
    %378 = vmatpush1.msra.mxu0 0.0
    %379 = vmatprep.subr.mxu0 0.0
    %380 = vmatpush1.msra.mxu0 0.0
    %381 = vmatprep.subr.mxu0 0.0
    %382 = vmatpush1.msra.mxu0 0.0
    %383 = vmatprep.subr.mxu0 0.0
    %384 = vmatpush1.msra.mxu0 0.0
    %385 = vmatprep.subr.mxu0 0.0
    %386 = vmatpush1.msra.mxu0 0.0
    %387 = vmatprep.subr.mxu0 0.0
    %388 = vmatpush1.msra.mxu0 0.0
    %389 = vmatprep.subr.mxu0 0.0
    %390 = vmatpush1.msra.mxu0 0.0
    %391 = vmatprep.subr.mxu0 0.0
    %392 = vmatpush1.msra.mxu0 0.0
    %393 = vmatprep.subr.mxu0 0.0
    %394 = vmatpush1.msra.mxu0 0.0
    %395 = vmatprep.subr.mxu0 0.0
    %396 = vmatpush1.msra.mxu0 0.0
    %397 = vmatprep.subr.mxu0 0.0
    %398 = vmatpush1.msra.mxu0 0.0
    %399 = vmatprep.subr.mxu0 0.0
    %400 = vmatpush1.msra.mxu0 0.0
    %401 = vmatprep.subr.mxu0 0.0
    %402 = vmatpush1.msra.mxu0 0.0
    %403 = vmatprep.subr.mxu0 0.0
    %404 = vmatpush1.msra.mxu0 0.0
    %405 = vmatprep.subr.mxu0 0.0
    %406 = vmatpush1.msra.mxu0 0.0
    %407 = vmatprep.subr.mxu0 0.0
    %408 = vmatpush1.msra.mxu0 0.0
    %409 = vmatprep.subr.mxu0 0.0
    %410 = vmatpush1.msra.mxu0 0.0
    %411 = vmatprep.mubr.f32.mxu0 0.0
    %412 = vmatmul.mubr.f32.gmra.mrb[0].mxu0 %v343
    %v413 = vpop.f32.mrb[0].mxu0
    %v414 = vadd.f32 0.0, %v413
    %v415 = vpop.f32.mrb[0].mxu0
    %416 = vmatprep.mubr.f32.mxu0 0.0
    %417 = vmatmul.mubr.f32.gmra.mrb[0].mxu0 %v345
    %v418 = vpop.f32.mrb[0].mxu0
    %v419 = vadd.f32 0.0, %v418
    %v420 = vpop.f32.mrb[0].mxu0
    %421 = vdwg.mxu0
    %v422 = vadd.f32 %v331, %v414
    %v423 = vadd.f32 %v336, %v419
    %vm424 = vcmask 1044480
    %v425 = vrot.slane %v152, 3
    %v426 = vrot.slane %v153, 3
    %v427 = vsel %vm424, %v425, %v426
    %v428 = vsel %vm180, %v427, 0
    %v430 = vsel %vm180, %v426, 0
    %432 = vmatprep.subr.mxu0 0.0
    %433 = vmatpush1.msra.mxu0 %v166
    %434 = vmatprep.subr.mxu0 0.0
    %435 = vmatpush1.msra.mxu0 %v167
    %436 = vmatprep.subr.mxu0 0.0
    %437 = vmatpush1.msra.mxu0 %v168
    %438 = vmatprep.subr.mxu0 0.0
    %439 = vmatpush1.msra.mxu0 %v169
    %440 = vmatprep.subr.mxu0 0.0
    %441 = vmatpush1.msra.mxu0 0.0
    %442 = vmatprep.subr.mxu0 0.0
    %443 = vmatpush1.msra.mxu0 0.0
    %444 = vmatprep.subr.mxu0 0.0
    %445 = vmatpush1.msra.mxu0 0.0
    %446 = vmatprep.subr.mxu0 0.0
    %447 = vmatpush1.msra.mxu0 0.0
    %448 = vmatprep.subr.mxu0 0.0
    %449 = vmatpush1.msra.mxu0 0.0
    %450 = vmatprep.subr.mxu0 0.0
    %451 = vmatpush1.msra.mxu0 0.0
    %452 = vmatprep.subr.mxu0 0.0
    %453 = vmatpush1.msra.mxu0 0.0
    %454 = vmatprep.subr.mxu0 0.0
    %455 = vmatpush1.msra.mxu0 0.0
    %456 = vmatprep.subr.mxu0 0.0
    %457 = vmatpush1.msra.mxu0 0.0
    %458 = vmatprep.subr.mxu0 0.0
    %459 = vmatpush1.msra.mxu0 0.0
    %460 = vmatprep.subr.mxu0 0.0
    %461 = vmatpush1.msra.mxu0 0.0
    %462 = vmatprep.subr.mxu0 0.0
    %463 = vmatpush1.msra.mxu0 0.0
    %464 = vmatprep.subr.mxu0 0.0
    %465 = vmatpush1.msra.mxu0 0.0
    %466 = vmatprep.subr.mxu0 0.0
    %467 = vmatpush1.msra.mxu0 0.0
    %468 = vmatprep.subr.mxu0 0.0
    %469 = vmatpush1.msra.mxu0 0.0
    %470 = vmatprep.subr.mxu0 0.0
    %471 = vmatpush1.msra.mxu0 0.0
    %472 = vmatprep.subr.mxu0 0.0
    %473 = vmatpush1.msra.mxu0 0.0
    %474 = vmatprep.subr.mxu0 0.0
    %475 = vmatpush1.msra.mxu0 0.0
    %476 = vmatprep.subr.mxu0 0.0
    %477 = vmatpush1.msra.mxu0 0.0
    %478 = vmatprep.subr.mxu0 0.0
    %479 = vmatpush1.msra.mxu0 0.0
    %480 = vmatprep.subr.mxu0 0.0
    %481 = vmatpush1.msra.mxu0 0.0
    %482 = vmatprep.subr.mxu0 0.0
    %483 = vmatpush1.msra.mxu0 0.0
    %484 = vmatprep.subr.mxu0 0.0
    %485 = vmatpush1.msra.mxu0 0.0
    %486 = vmatprep.subr.mxu0 0.0
    %487 = vmatpush1.msra.mxu0 0.0
    %488 = vmatprep.subr.mxu0 0.0
    %489 = vmatpush1.msra.mxu0 0.0
    %490 = vmatprep.subr.mxu0 0.0
    %491 = vmatpush1.msra.mxu0 0.0
    %492 = vmatprep.subr.mxu0 0.0
    %493 = vmatpush1.msra.mxu0 0.0
    %494 = vmatprep.subr.mxu0 0.0
    %495 = vmatpush1.msra.mxu0 0.0
    %496 = vmatprep.mubr.f32.mxu0 0.0
    %497 = vmatmul.mubr.f32.gmra.mrb[0].mxu0 %v428
    %v498 = vpop.f32.mrb[0].mxu0
    %v499 = vadd.f32 0.0, %v498
    %v500 = vpop.f32.mrb[0].mxu0
    %501 = vmatprep.mubr.f32.mxu0 0.0
    %502 = vmatmul.mubr.f32.gmra.mrb[0].mxu0 %v430
    %v503 = vpop.f32.mrb[0].mxu0
    %v504 = vadd.f32 0.0, %v503
    %v505 = vpop.f32.mrb[0].mxu0
    %506 = vdwg.mxu0
    %v507 = vadd.f32 %v422, %v499
    %v508 = vadd.f32 %v423, %v504
    %vm509 = vcmask 1043456
    %v510 = vrot.slane %v152, 4
    %v511 = vrot.slane %v153, 4
    %v512 = vsel %vm509, %v510, %v511
    %v513 = vsel %vm180, %v512, 0
    %v515 = vsel %vm180, %v511, 0
    %517 = vmatprep.subr.mxu0 0.0
    %518 = vmatpush1.msra.mxu0 %v170
    %519 = vmatprep.subr.mxu0 0.0
    %520 = vmatpush1.msra.mxu0 %v171
    %521 = vmatprep.subr.mxu0 0.0
    %522 = vmatpush1.msra.mxu0 %v172
    %523 = vmatprep.subr.mxu0 0.0
    %524 = vmatpush1.msra.mxu0 %v173
    %525 = vmatprep.subr.mxu0 0.0
    %526 = vmatpush1.msra.mxu0 0.0
    %527 = vmatprep.subr.mxu0 0.0
    %528 = vmatpush1.msra.mxu0 0.0
    %529 = vmatprep.subr.mxu0 0.0
    %530 = vmatpush1.msra.mxu0 0.0
    %531 = vmatprep.subr.mxu0 0.0
    %532 = vmatpush1.msra.mxu0 0.0
    %533 = vmatprep.subr.mxu0 0.0
    %534 = vmatpush1.msra.mxu0 0.0
    %535 = vmatprep.subr.mxu0 0.0
    %536 = vmatpush1.msra.mxu0 0.0
    %537 = vmatprep.subr.mxu0 0.0
    %538 = vmatpush1.msra.mxu0 0.0
    %539 = vmatprep.subr.mxu0 0.0
    %540 = vmatpush1.msra.mxu0 0.0
    %541 = vmatprep.subr.mxu0 0.0
    %542 = vmatpush1.msra.mxu0 0.0
    %543 = vmatprep.subr.mxu0 0.0
    %544 = vmatpush1.msra.mxu0 0.0
    %545 = vmatprep.subr.mxu0 0.0
    %546 = vmatpush1.msra.mxu0 0.0
    %547 = vmatprep.subr.mxu0 0.0
    %548 = vmatpush1.msra.mxu0 0.0
    %549 = vmatprep.subr.mxu0 0.0
    %550 = vmatpush1.msra.mxu0 0.0
    %551 = vmatprep.subr.mxu0 0.0
    %552 = vmatpush1.msra.mxu0 0.0
    %553 = vmatprep.subr.mxu0 0.0
    %554 = vmatpush1.msra.mxu0 0.0
    %555 = vmatprep.subr.mxu0 0.0
    %556 = vmatpush1.msra.mxu0 0.0
    %557 = vmatprep.subr.mxu0 0.0
    %558 = vmatpush1.msra.mxu0 0.0
    %559 = vmatprep.subr.mxu0 0.0
    %560 = vmatpush1.msra.mxu0 0.0
    %561 = vmatprep.subr.mxu0 0.0
    %562 = vmatpush1.msra.mxu0 0.0
    %563 = vmatprep.subr.mxu0 0.0
    %564 = vmatpush1.msra.mxu0 0.0
    %565 = vmatprep.subr.mxu0 0.0
    %566 = vmatpush1.msra.mxu0 0.0
    %567 = vmatprep.subr.mxu0 0.0
    %568 = vmatpush1.msra.mxu0 0.0
    %569 = vmatprep.subr.mxu0 0.0
    %570 = vmatpush1.msra.mxu0 0.0
    %571 = vmatprep.subr.mxu0 0.0
    %572 = vmatpush1.msra.mxu0 0.0
    %573 = vmatprep.subr.mxu0 0.0
    %574 = vmatpush1.msra.mxu0 0.0
    %575 = vmatprep.subr.mxu0 0.0
    %576 = vmatpush1.msra.mxu0 0.0
    %577 = vmatprep.subr.mxu0 0.0
    %578 = vmatpush1.msra.mxu0 0.0
    %579 = vmatprep.subr.mxu0 0.0
    %580 = vmatpush1.msra.mxu0 0.0
    %581 = vmatprep.mubr.f32.mxu0 0.0
    %582 = vmatmul.mubr.f32.gmra.mrb[0].mxu0 %v513
    %v583 = vpop.f32.mrb[0].mxu0
    %v584 = vadd.f32 0.0, %v583
    %v585 = vpop.f32.mrb[0].mxu0
    %586 = vmatprep.mubr.f32.mxu0 0.0
    %587 = vmatmul.mubr.f32.gmra.mrb[0].mxu0 %v515
    %v588 = vpop.f32.mrb[0].mxu0
    %v589 = vadd.f32 0.0, %v588
    %v590 = vpop.f32.mrb[0].mxu0
    %591 = vdwg.mxu0
    %v592 = vadd.f32 %v507, %v584
    %v593 = vadd.f32 %v508, %v589
    %v594 = vld [vmem:[%s4] sm:$0x1]
    %v596 = vlaneseq
    %v597 = vshrl.u32 %v596, 7
    %v598 = vsub.s32 0, %v597
    %v599 = vrot.slane %v594, %v598
    %v601 = vadd.f32 %v592, %v599
    %v602 = vadd.f32 %v593, %v599
    %v603 = vmax.f32 %v601, 0.0
    %v604 = vmax.f32 %v602, 0.0
    %v605 = vld [vmem:[%s5] sm:$0xff]
    %v606 = vld [vmem:[%s5 + $0x8] sm:$0xff]
    %v607 = vld [vmem:[%s5 + $0x10] sm:$0xff]
    %v608 = vld [vmem:[%s5 + $0x18] sm:$0xff]
    %v609 = vld [vmem:[%s6] sm:$0x1]
    %v611 = vlaneseq
    %v612 = vshrl.u32 %v611, 7
    %v613 = vsub.s32 0, %v612
    %v614 = vrot.slane %v609, %v613
    %v617 = vsel %vm180, %v603, 0
    %v620 = vsel %vm180, %v604, 0
    %622 = vmatprep.subr.mxu0 0.0
    %623 = vmatpush1.msra.mxu0 %v605
    %624 = vmatprep.subr.mxu0 0.0
    %625 = vmatpush1.msra.mxu0 %v606
    %626 = vmatprep.subr.mxu0 0.0
    %627 = vmatpush1.msra.mxu0 %v607
    %628 = vmatprep.subr.mxu0 0.0
    %629 = vmatpush1.msra.mxu0 %v608
    %630 = vmatprep.subr.mxu0 0.0
    %631 = vmatpush1.msra.mxu0 0.0
    %632 = vmatprep.subr.mxu0 0.0
    %633 = vmatpush1.msra.mxu0 0.0
    %634 = vmatprep.subr.mxu0 0.0
    %635 = vmatpush1.msra.mxu0 0.0
    %636 = vmatprep.subr.mxu0 0.0
    %637 = vmatpush1.msra.mxu0 0.0
    %638 = vmatprep.subr.mxu0 0.0
    %639 = vmatpush1.msra.mxu0 0.0
    %640 = vmatprep.subr.mxu0 0.0
    %641 = vmatpush1.msra.mxu0 0.0
    %642 = vmatprep.subr.mxu0 0.0
    %643 = vmatpush1.msra.mxu0 0.0
    %644 = vmatprep.subr.mxu0 0.0
    %645 = vmatpush1.msra.mxu0 0.0
    %646 = vmatprep.subr.mxu0 0.0
    %647 = vmatpush1.msra.mxu0 0.0
    %648 = vmatprep.subr.mxu0 0.0
    %649 = vmatpush1.msra.mxu0 0.0
    %650 = vmatprep.subr.mxu0 0.0
    %651 = vmatpush1.msra.mxu0 0.0
    %652 = vmatprep.subr.mxu0 0.0
    %653 = vmatpush1.msra.mxu0 0.0
    %654 = vmatprep.subr.mxu0 0.0
    %655 = vmatpush1.msra.mxu0 0.0
    %656 = vmatprep.subr.mxu0 0.0
    %657 = vmatpush1.msra.mxu0 0.0
    %658 = vmatprep.subr.mxu0 0.0
    %659 = vmatpush1.msra.mxu0 0.0
    %660 = vmatprep.subr.mxu0 0.0
    %661 = vmatpush1.msra.mxu0 0.0
    %662 = vmatprep.subr.mxu0 0.0
    %663 = vmatpush1.msra.mxu0 0.0
    %664 = vmatprep.subr.mxu0 0.0
    %665 = vmatpush1.msra.mxu0 0.0
    %666 = vmatprep.subr.mxu0 0.0
    %667 = vmatpush1.msra.mxu0 0.0
    %668 = vmatprep.subr.mxu0 0.0
    %669 = vmatpush1.msra.mxu0 0.0
    %670 = vmatprep.subr.mxu0 0.0
    %671 = vmatpush1.msra.mxu0 0.0
    %672 = vmatprep.subr.mxu0 0.0
    %673 = vmatpush1.msra.mxu0 0.0
    %674 = vmatprep.subr.mxu0 0.0
    %675 = vmatpush1.msra.mxu0 0.0
    %676 = vmatprep.subr.mxu0 0.0
    %677 = vmatpush1.msra.mxu0 0.0
    %678 = vmatprep.subr.mxu0 0.0
    %679 = vmatpush1.msra.mxu0 0.0
    %680 = vmatprep.subr.mxu0 0.0
    %681 = vmatpush1.msra.mxu0 0.0
    %682 = vmatprep.subr.mxu0 0.0
    %683 = vmatpush1.msra.mxu0 0.0
    %684 = vmatprep.subr.mxu0 0.0
    %685 = vmatpush1.msra.mxu0 0.0
    %686 = vmatprep.mubr.f32.mxu0 0.0
    %687 = vmatmul.mubr.f32.gmra.mrb[0].mxu0 %v617
    %v688 = vpop.f32.mrb[0].mxu0
    %v689 = vadd.f32 %v614, %v688
    %v690 = vpop.f32.mrb[0].mxu0
    %691 = vmatprep.mubr.f32.mxu0 0.0
    %692 = vmatmul.mubr.f32.gmra.mrb[0].mxu0 %v620
    %v693 = vpop.f32.mrb[0].mxu0
    %v694 = vadd.f32 %v614, %v693
    %v695 = vpop.f32.mrb[0].mxu0
    %696 = vdwg.mxu0
    %697 = vst.msk [vmem:[#allocation2] sm:$0xff] %vm70, %v689
    %vm698 = vcmask 124928
    %699 = vst.msk [vmem:[#allocation2 + $0x8] sm:$0x7] %vm698, %v694
    // Predicated region
    $region30: #{tpu_custom_call.1} parent=1 // pred_check
      _
    $region31: #{tpu_custom_call.1} parent=1 // pred_check_branch
      %701 = sbr.rel (0) target = $region33
    $region32: #{tpu_custom_call.1} parent=1 // pred_region
      %s703 = ssub.s32 256, 256
      %704 = vsyncadd [#allocation3], %s703
      %s705 = sshll.u32 [#allocation2], 4
      %s706 = int_to_ptr.vmem [resolvable:$true] %s705
      %711 = dma.vmem_to_hbm [thread:$0]  %s706, 256, %s7, [#allocation3], 128, 128, 8
    $region33: #{tpu_custom_call.1} parent=1 // pred_fallthru
      _
    // Predicated region
    $region34: #{tpu_custom_call.1} parent=1 // pred_check
      _
    $region35: #{tpu_custom_call.1} parent=1 // pred_check_branch
      %713 = sbr.rel (0) target = $region37
    $region36: #{tpu_custom_call.1} parent=1 // pred_region
      %714 = dma.done [#allocation3], 256
    $region37: #{tpu_custom_call.1} parent=1 // pred_fallthru
      _
    %715 = vsyncpa [#allocation3], 1

</llo_original>
